<compile_context>
chip_gen: v7x
topology: tpu7x:2x2x1
jax: 0.10.0
libtpu: 0.0.40
codegen_flags: <defaults>
</compile_context>

<pallas_src>
import numpy as np

import jax
import jax.numpy as jnp
from jax.experimental import pallas as pl
from jax.experimental.pallas import tpu as pltpu

_LANE = 128


def _round_up(n: int, m: int) -> int:
    return ((n + m - 1) // m) * m


def _sublane_multiple(dtype) -> int:
    # Packed dtypes tile sublanes in pairs/quads: bf16 -> 16, fp8/int8 -> 32.
    return {4: 8, 2: 16, 1: 32}.get(jnp.dtype(dtype).itemsize, 8)


def _vmem_cap_bytes() -> int:
    """Per-generation safe ceiling for the scoped VMEM limit."""
    try:
        kind = jax.devices()[0].device_kind.lower()
    except Exception:
        kind = ""
    if "v7" in kind:
        return 48 * 1024 * 1024       # v7x: 64 MiB physical per TensorCore
    return 100 * 1024 * 1024          # v5e / v6e: 128 MiB physical


def _pipeline_footprint_bytes(tm, tn, tk, in_itemsize, out_itemsize, in_bufs):
    x_b = in_bufs * tm * tk * in_itemsize
    w_b = in_bufs * tk * tn * in_itemsize
    bias_b = 2 * tn * 4
    out_b = 2 * tm * tn * out_itemsize
    acc_b = tm * tn * 4
    return x_b + w_b + bias_b + out_b + acc_b


def _select_tiles(B, K, N, *, compute_dtype, out_dtype,
                  tm_max=256, tn_max=512, tk_max=2048):
    """Pick tile sizes, padded dims, pipeline depth and the VMEM limit."""
    in_itemsize = jnp.dtype(compute_dtype).itemsize
    out_itemsize = jnp.dtype(out_dtype).itemsize
    sub = _sublane_multiple(compute_dtype)

    tm = min(tm_max, _round_up(B, sub))
    tn = min(tn_max, _round_up(N, _LANE))
    tk = min(tk_max, _round_up(K, _LANE))

    cap = _vmem_cap_bytes()
    # Safety valve: shrink K then N tiles if user-supplied maxima overshoot.
    while (_pipeline_footprint_bytes(tm, tn, tk, in_itemsize, out_itemsize, 3) > cap
           and (tk > 512 or tn > _LANE)):
        if tk > 512:
            tk = max(512, tk // 2)
        else:
            tn = max(_LANE, tn // 2)

    Mp = _round_up(B, tm)
    Np = _round_up(N, tn)
    Kp = _round_up(K, tk)

    # Megacore: ensure >=2 blocks along a "parallel" axis when possible so the
    # second TensorCore (v7x) is not idle.
    if Mp // tm == 1 and Np // tn == 1 and Np >= 2 * _LANE:
        for cand in range(tn - _LANE, _LANE - 1, -_LANE):
            if Np % cand == 0:
                tn = cand
                break

    m_blocks, k_blocks = Mp // tm, Kp // tk
    # Small-batch, reduction-heavy => weight-bandwidth bound: deepen pipeline.
    deep_buffer = (m_blocks == 1 and k_blocks >= 3)
    in_bufs = 3 if deep_buffer else 2

    footprint = _pipeline_footprint_bytes(tm, tn, tk, in_itemsize, out_itemsize, in_bufs)
    vmem_limit = int(min(cap, max(32 * 1024 * 1024, footprint + 8 * 1024 * 1024)))

    return dict(tm=tm, tn=tn, tk=tk, Mp=Mp, Np=Np, Kp=Kp,
                deep_buffer=deep_buffer, vmem_limit=vmem_limit)


def prepare_linear_params(weight, bias, tiles, compute_dtype=None):
    """Pad / transpose / cast the parameters ONCE (hoisted out of the hot path).

    weight: [N, K] (PyTorch nn.Linear layout), bias: [N].
    Returns w_kn: [Kp, Np] (contraction-ready), b2: [1, Np] float32.
    """
    N, K = weight.shape
    Np, Kp = tiles["Np"], tiles["Kp"]
    w = weight
    if (N, K) != (Np, Kp):
        w = jnp.pad(w, ((0, Np - N), (0, Kp - K)))
    w_kn = w.T                           # (Kp, Np); constant-foldable for static weights
    if compute_dtype is not None:
        w_kn = w_kn.astype(compute_dtype)
    b = bias if N == Np else jnp.pad(bias, (0, Np - N))
    b2 = b.reshape(1, Np).astype(jnp.float32)
    return w_kn, b2


def _linear_kernel(x_ref, w_ref, b_ref, o_ref, acc_ref):
    """One (tm, tn) output tile, accumulated over the K grid axis.

    x_ref: (tm, tk), w_ref: (tk, tn) pre-transposed, b_ref: (1, tn),
    o_ref: (tm, tn), acc_ref: (tm, tn) f32 accumulator (persists across K).
    """
    k = pl.program_id(2)

    @pl.when(k == 0)
    def _():
        acc_ref[...] = jnp.zeros_like(acc_ref)

    acc_ref[...] += jnp.dot(x_ref[...], w_ref[...],
                            preferred_element_type=jnp.float32)

    @pl.when(k == pl.num_programs(2) - 1)
    def _():
        o_ref[...] = (acc_ref[...] + b_ref[...]).astype(o_ref.dtype)


def _linear_pallas_prepared(x_pad, w_kn, b2, tiles, out_dtype):
    """Hot path: x_pad [Mp, Kp] (already padded/cast), w_kn [Kp, Np], b2 [1, Np]."""
    tm, tn, tk = tiles["tm"], tiles["tn"], tiles["tk"]
    Mp, Np, Kp = tiles["Mp"], tiles["Np"], tiles["Kp"]
    grid = (Mp // tm, Np // tn, Kp // tk)
    m_blocks, n_blocks, _ = grid

    if tiles["deep_buffer"]:
        x_spec = pl.BlockSpec((tm, tk), lambda i, j, k: (i, k),
                              pipeline_mode=pl.Buffered(3))
        w_spec = pl.BlockSpec((tk, tn), lambda i, j, k: (k, j),
                              pipeline_mode=pl.Buffered(3))
    else:
        x_spec = pl.BlockSpec((tm, tk), lambda i, j, k: (i, k))
        w_spec = pl.BlockSpec((tk, tn), lambda i, j, k: (k, j))

    out_itemsize = jnp.dtype(out_dtype).itemsize
    cost = pl.CostEstimate(
        flops=2 * Mp * Np * Kp,
        transcendentals=0,
        bytes_accessed=(w_kn.size * w_kn.dtype.itemsize * m_blocks
                        + x_pad.size * x_pad.dtype.itemsize * n_blocks
                        + b2.size * 4 * m_blocks
                        + Mp * Np * out_itemsize),
    )

    return pl.pallas_call(
        _linear_kernel,
        out_shape=jax.ShapeDtypeStruct((Mp, Np), out_dtype),
        grid=grid,
        in_specs=[x_spec,
                  w_spec,
                  pl.BlockSpec((1, tn), lambda i, j, k: (0, j))],
        out_specs=pl.BlockSpec((tm, tn), lambda i, j, k: (i, j)),
        scratch_shapes=[pltpu.VMEM((tm, tn), jnp.float32)],
        compiler_params=pltpu.CompilerParams(
            dimension_semantics=("parallel", "parallel", "arbitrary"),
            vmem_limit_bytes=tiles["vmem_limit"],
        ),
        cost_estimate=cost,
    )(x_pad, w_kn, b2)


def linear_pallas(x, weight, bias, *, compute_dtype=None,
                  tm=256, tn=512, tk=2048):
    """y = x @ weight.T + bias  (PyTorch nn.Linear semantics).

    x: [B, K]; weight: [N, K] (PyTorch layout, NOT pre-transposed); bias: [N].
    compute_dtype: optional operand dtype (e.g. jnp.bfloat16 on v6e/v7x);
    accumulation stays float32.
    # TODO(synk): fp8 weight path for v7x needs a per-channel scale epilogue.
    """
    out_dtype = x.dtype
    B, K = x.shape
    N = weight.shape[0]
    cdt = jnp.dtype(compute_dtype) if compute_dtype is not None else jnp.dtype(x.dtype)

    tiles = _select_tiles(B, K, N, compute_dtype=cdt, out_dtype=out_dtype,
                          tm_max=tm, tn_max=tn, tk_max=tk)

    # For static (inference) weights, call prepare_linear_params once at model
    # init and reuse; this convenience wrapper does it per call.
    w_kn, b2 = prepare_linear_params(weight, bias, tiles, compute_dtype)

    Mp, Kp = tiles["Mp"], tiles["Kp"]
    x_pad = x if (B, K) == (Mp, Kp) else jnp.pad(x, ((0, Mp - B), (0, Kp - K)))
    if compute_dtype is not None:
        x_pad = x_pad.astype(compute_dtype)

    out = _linear_pallas_prepared(x_pad, w_kn, b2, tiles, out_dtype)
    if (Mp, tiles["Np"]) != (B, N):
        out = out[:B, :N]
    return out


def _ref_linear_f64(x, weight, bias, operand_dtype=None):
    """float64 numpy reference (optionally with operands pre-rounded to operand_dtype)."""
    xj, wj = jnp.asarray(x), jnp.asarray(weight)
    if operand_dtype is not None:
        xj = xj.astype(operand_dtype).astype(jnp.float32)
        wj = wj.astype(operand_dtype).astype(jnp.float32)
    xn = np.asarray(xj, dtype=np.float64)
    wn = np.asarray(wj, dtype=np.float64)
    bn = np.asarray(bias, dtype=np.float64)
    return xn @ wn.T + bn


if __name__ == "__main__":
    # Shapes consistent with SimpleModel: batch=8, input_dim=32, hidden_dim=16.
    batch, input_dim, hidden_dim = 8, 32, 16

    key = jax.random.PRNGKey(0)
    kx, kw, kb = jax.random.split(key, 3)
    bound = 1.0 / jnp.sqrt(jnp.float32(input_dim))
    weight = jax.random.uniform(kw, (hidden_dim, input_dim), jnp.float32, -bound, bound)
    bias = jax.random.uniform(kb, (hidden_dim,), jnp.float32, -bound, bound)
    x = jax.random.normal(kx, (batch, input_dim), jnp.float32)

    y = jax.block_until_ready(linear_pallas(x, weight, bias))
    assert y.shape == (batch, hidden_dim)
    assert np.allclose(np.asarray(y), _ref_linear_f64(x, weight, bias),
                       atol=1e-4, rtol=1e-4)

    # Multi-N-block (exercises the >=2-parallel-block megacore split).
    k2 = jax.random.split(jax.random.PRNGKey(1), 3)
    B2, K2, N2 = 8, 512, 256
    w2 = jax.random.uniform(k2[1], (N2, K2), jnp.float32, -0.05, 0.05)
    b2v = jax.random.uniform(k2[2], (N2,), jnp.float32, -0.05, 0.05)
    x2 = jax.random.normal(k2[0], (B2, K2), jnp.float32)
    y2 = jax.block_until_ready(linear_pallas(x2, w2, b2v))
    assert np.allclose(np.asarray(y2), _ref_linear_f64(x2, w2, b2v),
                       atol=1e-3, rtol=1e-3)

    # Multi-K-block small-batch regime (K accumulation + Buffered(3) pipeline).
    k3 = jax.random.split(jax.random.PRNGKey(2), 3)
    B3, K3, N3 = 8, 2048, 256
    w3 = jax.random.uniform(k3[1], (N3, K3), jnp.float32, -0.03, 0.03)
    b3v = jax.random.uniform(k3[2], (N3,), jnp.float32, -0.03, 0.03)
    x3 = jax.random.normal(k3[0], (B3, K3), jnp.float32)
    y3 = jax.block_until_ready(linear_pallas(x3, w3, b3v, tk=512))
    assert np.allclose(np.asarray(y3), _ref_linear_f64(x3, w3, b3v),
                       atol=1e-3, rtol=1e-3)

    # bf16-operand path (packed sublane rounding: B=24 -> tm rounded to 32).
    k4 = jax.random.split(jax.random.PRNGKey(3), 3)
    B4, K4, N4 = 24, 512, 384
    w4 = jax.random.uniform(k4[1], (N4, K4), jnp.float32, -0.05, 0.05)
    b4v = jax.random.uniform(k4[2], (N4,), jnp.float32, -0.05, 0.05)
    x4 = jax.random.normal(k4[0], (B4, K4), jnp.float32)
    y4 = jax.block_until_ready(linear_pallas(x4, w4, b4v, compute_dtype=jnp.bfloat16))
    assert np.allclose(np.asarray(y4),
                       _ref_linear_f64(x4, w4, b4v, operand_dtype=jnp.bfloat16),
                       atol=2e-3, rtol=2e-3)

    print("KERNEL_OK")
</pallas_src>

<mosaic_0001>
module attributes {stable_mosaic.version = 11 : i64} {
  func.func @_linear_kernel(%arg0: i32, %arg1: i32, %arg2: i32, %arg3: memref<8x128xf32, #tpu.memory_space<vmem>>, %arg4: memref<128x128xf32, #tpu.memory_space<vmem>>, %arg5: memref<1x128xf32, #tpu.memory_space<vmem>>, %arg6: memref<8x128xf32, #tpu.memory_space<vmem>>, %arg7: memref<8x128xf32, #tpu.memory_space<vmem>>) attributes {dimension_semantics = [#tpu.dimension_semantics<parallel>, #tpu.dimension_semantics<parallel>, #tpu.dimension_semantics<arbitrary>], iteration_bounds = array<i64: 1, 1, 1>, scalar_prefetch = 0 : i64, scratch_operands = 1 : i64, tpu.core_type = #tpu.core_type<tc>, window_params = [{transform_indices = @transform_0, window_bounds = array<i64: 8, 128>}, {transform_indices = @transform_1, window_bounds = array<i64: 128, 128>}, {transform_indices = @transform_2, window_bounds = array<i64: 1, 128>}, {transform_indices = @transform_3, window_bounds = array<i64: 8, 128>}]} {
    %c0_i32 = arith.constant 0 : i32
    %0 = arith.cmpi eq, %arg2, %c0_i32 : i32
    %1 = arith.extui %0 : i1 to i32
    %c0_i32_0 = arith.constant 0 : i32
    %2 = arith.cmpi ne, %1, %c0_i32_0 : i32
    scf.if %2 {
      %cst_10 = arith.constant 0.000000e+00 : f32
      %12 = vector.broadcast %cst_10 : f32 to vector<8x128xf32>
      %c0_11 = arith.constant 0 : index
      %c0_12 = arith.constant 0 : index
      %13 = vector.load %arg7[%c0_11, %c0_12] : memref<8x128xf32, #tpu.memory_space<vmem>>, vector<8x128xf32>
      tpu.vector_store %arg7[%c0_11, %c0_12], %12 {strides = array<i32>} : memref<8x128xf32, #tpu.memory_space<vmem>>, vector<8x128xf32>,
    } else {
    }
    %c0 = arith.constant 0 : index
    %c0_1 = arith.constant 0 : index
    %3 = vector.load %arg7[%c0, %c0_1] : memref<8x128xf32, #tpu.memory_space<vmem>>, vector<8x128xf32>
    %c0_2 = arith.constant 0 : index
    %c0_3 = arith.constant 0 : index
    %4 = vector.load %arg3[%c0_2, %c0_3] : memref<8x128xf32, #tpu.memory_space<vmem>>, vector<8x128xf32>
    %c0_4 = arith.constant 0 : index
    %c0_5 = arith.constant 0 : index
    %5 = vector.load %arg4[%c0_4, %c0_5] : memref<128x128xf32, #tpu.memory_space<vmem>>, vector<128x128xf32>
    %cst = arith.constant dense<0.000000e+00> : vector<8x128xf32>
    %6 = tpu.matmul %4, %5, %cst {dimension_numbers = #tpu.dot_dimension_numbers<[1], [0], [0], [1], [0, 0, 1, 1], [], []>} : vector<8x128xf32>, vector<128x128xf32>, vector<8x128xf32> -> vector<8x128xf32>
    %7 = arith.addf %3, %6 : vector<8x128xf32>
    %c0_6 = arith.constant 0 : index
    %c0_7 = arith.constant 0 : index
    %8 = vector.load %arg7[%c0_6, %c0_7] : memref<8x128xf32, #tpu.memory_space<vmem>>, vector<8x128xf32>
    tpu.vector_store %arg7[%c0_6, %c0_7], %7 {strides = array<i32>} : memref<8x128xf32, #tpu.memory_space<vmem>>, vector<8x128xf32>,
    %c0_i32_8 = arith.constant 0 : i32
    %9 = arith.cmpi eq, %arg2, %c0_i32_8 : i32
    %10 = arith.extui %9 : i1 to i32
    %c0_i32_9 = arith.constant 0 : i32
    %11 = arith.cmpi ne, %10, %c0_i32_9 : i32
    scf.if %11 {
      %c0_10 = arith.constant 0 : index
      %c0_11 = arith.constant 0 : index
      %12 = vector.load %arg7[%c0_10, %c0_11] : memref<8x128xf32, #tpu.memory_space<vmem>>, vector<8x128xf32>
      %c0_12 = arith.constant 0 : index
      %c0_13 = arith.constant 0 : index
      %13 = vector.load %arg5[%c0_12, %c0_13] : memref<1x128xf32, #tpu.memory_space<vmem>>, vector<1x128xf32>
      %14 = vector.broadcast %13 : vector<1x128xf32> to vector<8x128xf32>
      %15 = arith.addf %12, %14 : vector<8x128xf32>
      %c0_14 = arith.constant 0 : index
      %c0_15 = arith.constant 0 : index
      %16 = vector.load %arg6[%c0_14, %c0_15] : memref<8x128xf32, #tpu.memory_space<vmem>>, vector<8x128xf32>
      tpu.vector_store %arg6[%c0_14, %c0_15], %15 {strides = array<i32>} : memref<8x128xf32, #tpu.memory_space<vmem>>, vector<8x128xf32>,
    } else {
    }
    return
  }
  func.func @transform_0(%arg0: i32, %arg1: i32, %arg2: i32) -> (i32, i32) {
    %c0_i32 = arith.constant 0 : i32
    return %arg0, %arg2 : i32, i32
  }
  func.func @transform_1(%arg0: i32, %arg1: i32, %arg2: i32) -> (i32, i32) {
    %c0_i32 = arith.constant 0 : i32
    return %arg2, %arg1 : i32, i32
  }
  func.func @transform_2(%arg0: i32, %arg1: i32, %arg2: i32) -> (i32, i32) {
    %c0_i32 = arith.constant 0 : i32
    %c0_i32_0 = arith.constant 0 : i32
    return %c0_i32, %arg1 : i32, i32
  }
  func.func @transform_3(%arg0: i32, %arg1: i32, %arg2: i32) -> (i32, i32) {
    %c0_i32 = arith.constant 0 : i32
    return %arg0, %arg1 : i32, i32
  }
}

</mosaic_0001>

<llo_original>
// kernel: tpu_custom_call.1
$region0: #{tpu_custom_call.1}
  #allocation0 [shape = 'u32[]', space=smem, size = 0x4, offset = 0x4, fixed_abs, tag = 'smem constant byte address 0x4 - core index']
  #allocation1 [shape = 'u32[144,128]{1,0:T(1,128)}', space=vmem, size = 0x12000, scoped, tag = 'internal scratch']
  #allocation2 [shape = 'f32[8,128]{1,0:T(8,128)}', space=vmem, size = 0x1000, scoped, tag = 'scratch operand']
  %s0 = inlined_call_operand.hbm [shape: f32[8,128], index: 0, kind: input, shape index: {}]
  %s1 = inlined_call_operand.hbm [shape: f32[128,128], index: 1, kind: input, shape index: {}]
  %s2 = inlined_call_operand.vmem [shape: f32[1,128], index: 2, kind: input, shape index: {}]
  %s3 = inlined_call_operand.hbm [shape: f32[8,128], index: 3, kind: output, shape index: {}]
  %s4 = sld [smem:[#allocation0]]
  $region38: #{tpu_custom_call.1} parent=0
    _
  %s6 = ssub.s32 1, %s4
  %s7 = scalar_select 0, %s6, %s4
  $region1: #{tpu_custom_call.1} parent=0
    #allocation3 [shape = 'u8[4096]{0}', space=vmem, size = 0x1000, scoped, tag = 'input window, operand 0, single buffered']
    #allocation4 [shape = 's32[1]{0}', space=sflag, size = 0x4, scoped, tag = 'scoped memory for tpu_custom_call.1']
    #allocation5 [shape = 's32[1]{0}', space=sflag, size = 0x4, scoped, tag = 'scoped memory for tpu_custom_call.1']
    #allocation6 [shape = 'u8[65536]{0}', space=vmem, size = 0x10000, scoped, tag = 'input window, operand 1, single buffered']
    #allocation7 [shape = 's32[1]{0}', space=sflag, size = 0x4, scoped, tag = 'scoped memory for tpu_custom_call.1']
    #allocation8 [shape = 'u8[4096]{0}', space=vmem, size = 0x1000, scoped, tag = 'output window, operand 0, single buffered']
    %8 = vsyncpa [#allocation4], 0
    %9 = vsyncpa [#allocation7], 0
    %10 = vsyncpa [#allocation5], 0
    // Predicated region
    $region2: #{tpu_custom_call.1} parent=1 // pred_check
      _
    $region3: #{tpu_custom_call.1} parent=1 // pred_check_branch
      %12 = sbr.rel (0) target = $region5
    $region4: #{tpu_custom_call.1} parent=1 // pred_region
      %s14 = ssub.s32 128, 128
      %15 = vsyncadd [#allocation4], %s14
      %s17 = sshll.u32 [#allocation3], 4
      %s18 = int_to_ptr.vmem [resolvable:$true] %s17
      %20 = dma.hbm_to_vmem [thread:$0]  %s0, 128, %s18, [#allocation4]
    $region5: #{tpu_custom_call.1} parent=1 // pred_fallthru
      _
    // Predicated region
    $region6: #{tpu_custom_call.1} parent=1 // pred_check
      _
    $region7: #{tpu_custom_call.1} parent=1 // pred_check_branch
      %22 = sbr.rel (0) target = $region9
    $region8: #{tpu_custom_call.1} parent=1 // pred_region
      %s24 = ssub.s32 2048, 2048
      %25 = vsyncadd [#allocation7], %s24
      %s26 = sshll.u32 [#allocation6], 4
      %s27 = int_to_ptr.vmem [resolvable:$true] %s26
      %32 = dma.hbm_to_vmem [thread:$0]  %s1, 2048, %s27, [#allocation7], 128, 128, 8
    $region9: #{tpu_custom_call.1} parent=1 // pred_fallthru
      _
    // Predicated region
    $region10: #{tpu_custom_call.1} parent=1 // pred_check
      _
    $region11: #{tpu_custom_call.1} parent=1 // pred_check_branch
      %34 = sbr.rel (0) target = $region13
    $region12: #{tpu_custom_call.1} parent=1 // pred_region
      _
    $region13: #{tpu_custom_call.1} parent=1 // pred_fallthru
      _
    // Predicated region
    $region14: #{tpu_custom_call.1} parent=1 // pred_check
      _
    $region15: #{tpu_custom_call.1} parent=1 // pred_check_branch
      %36 = sbr.rel (0) target = $region17
    $region16: #{tpu_custom_call.1} parent=1 // pred_region
      %37 = dma.done [#allocation4], 128
    $region17: #{tpu_custom_call.1} parent=1 // pred_fallthru
      _
    // Predicated region
    $region18: #{tpu_custom_call.1} parent=1 // pred_check
      _
    $region19: #{tpu_custom_call.1} parent=1 // pred_check_branch
      %39 = sbr.rel (0) target = $region21
    $region20: #{tpu_custom_call.1} parent=1 // pred_region
      %40 = dma.done [#allocation7], 2048
    $region21: #{tpu_custom_call.1} parent=1 // pred_fallthru
      _
    %p41 = scmp.eq.s32.totalorder 0, 0
    // Predicated region
    $region22: #{tpu_custom_call.1} parent=1 // pred_check
      %p42 = pneg %p41
    $region23: #{tpu_custom_call.1} parent=1 // pred_check_branch
      %44 = sbr.rel (%p42) target = $region25
    $region24: #{tpu_custom_call.1} parent=1 // pred_region
      %45 = vst [vmem:[#allocation2] sm:$0xff] 0.0
    $region25: #{tpu_custom_call.1} parent=1 // pred_fallthru
      _
    %v46 = vld [vmem:[#allocation2] sm:$0xff]
    %v47 = vld [vmem:[#allocation3] sm:$0xff]
    %v48 = vld [vmem:[#allocation6] sm:$0xff]
    %v49 = vld [vmem:[#allocation6 + $0x8] sm:$0xff]
    %v50 = vld [vmem:[#allocation6 + $0x10] sm:$0xff]
    %v51 = vld [vmem:[#allocation6 + $0x18] sm:$0xff]
    %v52 = vld [vmem:[#allocation6 + $0x20] sm:$0xff]
    %v53 = vld [vmem:[#allocation6 + $0x28] sm:$0xff]
    %v54 = vld [vmem:[#allocation6 + $0x30] sm:$0xff]
    %v55 = vld [vmem:[#allocation6 + $0x38] sm:$0xff]
    %v56 = vld [vmem:[#allocation6 + $0x40] sm:$0xff]
    %v57 = vld [vmem:[#allocation6 + $0x48] sm:$0xff]
    %v58 = vld [vmem:[#allocation6 + $0x50] sm:$0xff]
    %v59 = vld [vmem:[#allocation6 + $0x58] sm:$0xff]
    %v60 = vld [vmem:[#allocation6 + $0x60] sm:$0xff]
    %v61 = vld [vmem:[#allocation6 + $0x68] sm:$0xff]
    %v62 = vld [vmem:[#allocation6 + $0x70] sm:$0xff]
    %v63 = vld [vmem:[#allocation6 + $0x78] sm:$0xff]
    %64 = vmatprep.subr.mxu0 0.0
    %65 = vmatpush1.msra.mxu0 %v48
    %66 = vmatprep.subr.mxu0 0.0
    %67 = vmatpush1.msra.mxu0 %v49
    %68 = vmatprep.subr.mxu0 0.0
    %69 = vmatpush1.msra.mxu0 %v50
    %70 = vmatprep.subr.mxu0 0.0
    %71 = vmatpush1.msra.mxu0 %v51
    %72 = vmatprep.subr.mxu0 0.0
    %73 = vmatpush1.msra.mxu0 %v52
    %74 = vmatprep.subr.mxu0 0.0
    %75 = vmatpush1.msra.mxu0 %v53
    %76 = vmatprep.subr.mxu0 0.0
    %77 = vmatpush1.msra.mxu0 %v54
    %78 = vmatprep.subr.mxu0 0.0
    %79 = vmatpush1.msra.mxu0 %v55
    %80 = vmatprep.subr.mxu0 0.0
    %81 = vmatpush1.msra.mxu0 %v56
    %82 = vmatprep.subr.mxu0 0.0
    %83 = vmatpush1.msra.mxu0 %v57
    %84 = vmatprep.subr.mxu0 0.0
    %85 = vmatpush1.msra.mxu0 %v58
    %86 = vmatprep.subr.mxu0 0.0
    %87 = vmatpush1.msra.mxu0 %v59
    %88 = vmatprep.subr.mxu0 0.0
    %89 = vmatpush1.msra.mxu0 %v60
    %90 = vmatprep.subr.mxu0 0.0
    %91 = vmatpush1.msra.mxu0 %v61
    %92 = vmatprep.subr.mxu0 0.0
    %93 = vmatpush1.msra.mxu0 %v62
    %94 = vmatprep.subr.mxu0 0.0
    %95 = vmatpush1.msra.mxu0 %v63
    %96 = vmatprep.subr.mxu0 0.0
    %97 = vmatpush1.msra.mxu0 0.0
    %98 = vmatprep.subr.mxu0 0.0
    %99 = vmatpush1.msra.mxu0 0.0
    %100 = vmatprep.subr.mxu0 0.0
    %101 = vmatpush1.msra.mxu0 0.0
    %102 = vmatprep.subr.mxu0 0.0
    %103 = vmatpush1.msra.mxu0 0.0
    %104 = vmatprep.subr.mxu0 0.0
    %105 = vmatpush1.msra.mxu0 0.0
    %106 = vmatprep.subr.mxu0 0.0
    %107 = vmatpush1.msra.mxu0 0.0
    %108 = vmatprep.subr.mxu0 0.0
    %109 = vmatpush1.msra.mxu0 0.0
    %110 = vmatprep.subr.mxu0 0.0
    %111 = vmatpush1.msra.mxu0 0.0
    %112 = vmatprep.subr.mxu0 0.0
    %113 = vmatpush1.msra.mxu0 0.0
    %114 = vmatprep.subr.mxu0 0.0
    %115 = vmatpush1.msra.mxu0 0.0
    %116 = vmatprep.subr.mxu0 0.0
    %117 = vmatpush1.msra.mxu0 0.0
    %118 = vmatprep.subr.mxu0 0.0
    %119 = vmatpush1.msra.mxu0 0.0
    %120 = vmatprep.subr.mxu0 0.0
    %121 = vmatpush1.msra.mxu0 0.0
    %122 = vmatprep.subr.mxu0 0.0
    %123 = vmatpush1.msra.mxu0 0.0
    %124 = vmatprep.subr.mxu0 0.0
    %125 = vmatpush1.msra.mxu0 0.0
    %126 = vmatprep.subr.mxu0 0.0
    %127 = vmatpush1.msra.mxu0 0.0
    %128 = vmatprep.mubr.f32.mxu0 0.0
    %129 = vmatmul.mubr.f32.gmra.mrb[0].mxu0 %v47
    %v130 = vpop.f32.mrb[0].mxu0
    %v131 = vadd.f32 0.0, %v130
    %v132 = vpop.f32.mrb[0].mxu0
    %133 = vdwg.mxu0
    %v134 = vadd.f32 %v46, %v131
    %135 = vst [vmem:[#allocation2] sm:$0xff] %v134
    // Predicated region
    $region26: #{tpu_custom_call.1} parent=1 // pred_check
      %p136 = pneg %p41
    $region27: #{tpu_custom_call.1} parent=1 // pred_check_branch
      %138 = sbr.rel (%p136) target = $region29
    $region28: #{tpu_custom_call.1} parent=1 // pred_region
      %v139 = vld [vmem:[#allocation2] sm:$0xff]
      %v140 = vld [vmem:[%s2] sm:$0x1]
      %v142 = vlaneseq
      %v143 = vshrl.u32 %v142, 7
      %v144 = vsub.s32 0, %v143
      %v145 = vrot.slane %v140, %v144
      %v147 = vadd.f32 %v139, %v145
      %148 = vst [vmem:[#allocation8] sm:$0xff] %v147
    $region29: #{tpu_custom_call.1} parent=1 // pred_fallthru
      _
    // Predicated region
    $region30: #{tpu_custom_call.1} parent=1 // pred_check
      _
    $region31: #{tpu_custom_call.1} parent=1 // pred_check_branch
      %150 = sbr.rel (0) target = $region33
    $region32: #{tpu_custom_call.1} parent=1 // pred_region
      %s152 = ssub.s32 128, 128
      %153 = vsyncadd [#allocation5], %s152
      %s155 = sshll.u32 [#allocation8], 4
      %s156 = int_to_ptr.vmem [resolvable:$true] %s155
      %158 = dma.vmem_to_hbm [thread:$0]  %s156, 128, %s3, [#allocation5]
    $region33: #{tpu_custom_call.1} parent=1 // pred_fallthru
      _
    // Predicated region
    $region34: #{tpu_custom_call.1} parent=1 // pred_check
      _
    $region35: #{tpu_custom_call.1} parent=1 // pred_check_branch
      %160 = sbr.rel (0) target = $region37
    $region36: #{tpu_custom_call.1} parent=1 // pred_region
      %161 = dma.done [#allocation5], 128
    $region37: #{tpu_custom_call.1} parent=1 // pred_fallthru
      _
    %162 = vsyncpa [#allocation4], 1
    %163 = vsyncpa [#allocation7], 1
    %164 = vsyncpa [#allocation5], 1

</llo_original>
